<compile_context>
chip_gen: v7x
topology: tpu7x:2x2x1
jax: 0.10.0
libtpu: 0.0.40
codegen_flags: <defaults>
</compile_context>

<pallas_src>
import jax
import jax.numpy as jnp
from jax.experimental import pallas as pl
from jax.experimental.pallas import tpu as pltpu


def _round_up(x, m):
    return (x + m - 1) // m * m


def _fcn_pp_kernel(x_ref, t_ref, w1_ref, b1_ref, w2_ref, b2_ref, o_ref, h_acc):
    """One (batch-tile, K-tile) grid step.

    x_ref, t_ref : (tb, tk)  f32   event times (batch tile, K tile)
    w1_ref       : (tk, Hp)  bf16  first Linear weight, stored (in, out)
    b1_ref       : (1, Hp)   f32
    w2_ref       : (1, Hp)   f32   second Linear weight as a lane-dense row
    b2_ref       : (1, 1)    f32   scalar in SMEM
    o_ref        : (tb, 1)   f32
    h_acc        : (tb, Hp)  f32   VMEM accumulator for the first layer
    """
    k = pl.program_id(1)

    @pl.when(k == 0)
    def _():
        h_acc[...] = jnp.zeros_like(h_acc)

    # Fused |t - x| in f32 (VPU); feed the MXU bf16 with f32 accumulation.
    inter = jnp.abs(t_ref[...] - x_ref[...])
    h_acc[...] += jnp.dot(inter.astype(jnp.bfloat16), w1_ref[...],
                          preferred_element_type=jnp.float32)

    @pl.when(k == pl.num_programs(1) - 1)
    def _():
        h1 = jnp.maximum(h_acc[...] + b1_ref[...], 0.0)              # ReLU
        # Linear(hidden, 1) as VPU multiply + lane reduce (no 2nd MXU trip).
        o = jnp.sum(h1 * w2_ref[...], axis=-1, keepdims=True) + b2_ref[0, 0]
        o_ref[...] = jnp.abs(o)


def prepare_params(w1, b1, w2, b2, *, w1_tile_budget_bytes=8 * 1024 * 1024):
    """One-time packing of the module's weights for the kernel.

    w1: (input_size, hidden)   Linear 0 weight, stored transposed (in, out)
    b1: (hidden,)              Linear 0 bias
    w2: (hidden, 1)            Linear 1 weight, stored transposed (in, out)
    b2: scalar / (1,) / (1,1)  Linear 1 bias
    """
    n, h = w1.shape
    hp = _round_up(h, 128)

    # K tile: largest multiple of 128 whose double-buffered bf16 w1 tile stays
    # within the budget (well under v7x's ~32 MiB scoped VMEM).
    tk = max(128, (w1_tile_budget_bytes // (hp * 2 * 2)) // 128 * 128)
    np_ = _round_up(n, 128)
    tk = min(tk, np_)
    np_ = _round_up(np_, tk)

    w1p = jnp.zeros((np_, hp), jnp.bfloat16).at[:n, :h].set(
        jnp.asarray(w1, jnp.float32).astype(jnp.bfloat16))
    b1p = jnp.zeros((1, hp), jnp.float32).at[:, :h].set(
        jnp.asarray(b1, jnp.float32).reshape(1, h))
    w2p = jnp.zeros((1, hp), jnp.float32).at[:, :h].set(
        jnp.asarray(w2, jnp.float32).reshape(1, h))
    b2p = jnp.asarray(b2, jnp.float32).reshape(1, 1)
    return {"w1": w1p, "b1": b1p, "w2": w2p, "b2": b2p,
            "n": n, "np": np_, "hp": hp, "tk": tk}


def fcn_point_process_forward(x, t, params):
    """Batched FCNPointProcess forward.

    x, t: arrays that broadcast together.  A leading batch axis (ndim >= 2)
    indexes independent forward passes; each example's remaining elements are
    flattened to input_size, matching the module's reshape(1, -1).
    Returns (B, 1) float32 (B = 1 for unbatched inputs).
    """
    n, np_, hp, tk = params["n"], params["np"], params["hp"], params["tk"]

    t, x = jnp.broadcast_arrays(jnp.asarray(t, jnp.float32),
                                jnp.asarray(x, jnp.float32))
    if x.ndim <= 1:
        x = x.reshape(1, -1)
        t = t.reshape(1, -1)
    else:
        x = x.reshape(x.shape[0], -1)
        t = t.reshape(t.shape[0], -1)
    if x.shape[1] != n:
        raise ValueError(f"expected {n} elements per example, got {x.shape[1]}")

    b = x.shape[0]
    bp = _round_up(b, 8)
    if bp <= 256:
        tb = bp
    else:
        tb = 128
        bp = _round_up(bp, tb)

    xp = jnp.pad(x, ((0, bp - b), (0, np_ - n)))
    tp = jnp.pad(t, ((0, bp - b), (0, np_ - n)))

    grid_spec = pltpu.PrefetchScalarGridSpec(
        num_scalar_prefetch=0,
        grid=(bp // tb, np_ // tk),
        in_specs=[
            pl.BlockSpec((tb, tk), lambda bi, ki: (bi, ki)),     # x tile
            pl.BlockSpec((tb, tk), lambda bi, ki: (bi, ki)),     # t tile
            pl.BlockSpec((tk, hp), lambda bi, ki: (ki, 0)),      # w1 (bf16)
            pl.BlockSpec((1, hp), lambda bi, ki: (0, 0)),        # b1
            pl.BlockSpec((1, hp), lambda bi, ki: (0, 0)),        # w2 row
            pl.BlockSpec(memory_space=pltpu.MemorySpace.SMEM),   # b2 scalar
        ],
        out_specs=pl.BlockSpec((tb, 1), lambda bi, ki: (bi, 0)),
        scratch_shapes=[pltpu.VMEM((tb, hp), jnp.float32)],
    )
    out = pl.pallas_call(
        _fcn_pp_kernel,
        out_shape=jax.ShapeDtypeStruct((bp, 1), jnp.float32),
        grid_spec=grid_spec,
        compiler_params=pltpu.CompilerParams(
            dimension_semantics=("parallel", "arbitrary")),
    )(xp, tp, params["w1"], params["b1"], params["w2"], params["b2"])
    return out[:b]


def init_params(input_size, key):
    """Synthetic init mirroring FCNPointProcess(input_size, num_layers=2, step=2).

    Layer 0: Linear(input_size, input_size//2) -> xavier_uniform weight, bias 0.01
    Layer 1: Linear(input_size//2, 1)          -> torch-default-style uniform init
    Weights are returned transposed as (in, out) for the kernel.
    """
    hidden = input_size // 2
    k1, k2, k3 = jax.random.split(key, 3)

    bound1 = (6.0 / (input_size + hidden)) ** 0.5
    w1 = jax.random.uniform(k1, (input_size, hidden), jnp.float32, -bound1, bound1)
    b1 = jnp.full((hidden,), 0.01, jnp.float32)

    bound2 = 1.0 / (hidden ** 0.5)
    w2 = jax.random.uniform(k2, (hidden, 1), jnp.float32, -bound2, bound2)
    b2 = jax.random.uniform(k3, (1, 1), jnp.float32, -bound2, bound2)
    return w1, b1, w2, b2


if __name__ == "__main__":
    input_size = 96        # first Linear in_features; hidden = 48 -> padded to 128 lanes
    batch = 8              # 8 independent forward passes in one kernel call

    key = jax.random.PRNGKey(0)
    kx, kt, kp = jax.random.split(key, 3)

    x = jax.random.uniform(kx, (batch, input_size), jnp.float32)
    t = jax.random.uniform(kt, (batch, input_size), jnp.float32)

    w1, b1, w2, b2 = init_params(input_size, kp)
    params = prepare_params(w1, b1, w2, b2)

    # Keep wrapper + kernel in one jit so the padding/launch overhead fuses.
    fwd = jax.jit(lambda x, t: fcn_point_process_forward(x, t, params))
    out = jax.block_until_ready(fwd(x, t))
    assert out.shape == (batch, 1)

    # Pure-JAX reference with the same bf16 weight feed / f32 accumulation.
    inter = jnp.abs(t - x).astype(jnp.float32)
    h = jnp.dot(inter.astype(jnp.bfloat16), w1.astype(jnp.bfloat16),
                preferred_element_type=jnp.float32)
    h = jnp.maximum(h + b1.reshape(1, -1), 0.0)
    ref = jnp.abs(h @ w2 + b2.reshape(1, 1))
    assert jnp.allclose(out, ref, rtol=1e-4, atol=1e-4), (out, ref)

    print("KERNEL_OK")
</pallas_src>

<mosaic_0001>
module attributes {stable_mosaic.version = 11 : i64} {
  func.func @_fcn_pp_kernel(%arg0: i32, %arg1: i32, %arg2: memref<8x128xf32, #tpu.memory_space<vmem>>, %arg3: memref<8x128xf32, #tpu.memory_space<vmem>>, %arg4: memref<128x128xbf16, #tpu.memory_space<vmem>>, %arg5: memref<1x128xf32, #tpu.memory_space<vmem>>, %arg6: memref<1x128xf32, #tpu.memory_space<vmem>>, %arg7: memref<1x1xf32, #tpu.memory_space<smem>>, %arg8: memref<8x1xf32, #tpu.memory_space<vmem>>, %arg9: memref<8x128xf32, #tpu.memory_space<vmem>>) attributes {dimension_semantics = [#tpu.dimension_semantics<parallel>, #tpu.dimension_semantics<arbitrary>], iteration_bounds = array<i64: 1, 1>, scalar_prefetch = 0 : i64, scratch_operands = 1 : i64, tpu.core_type = #tpu.core_type<tc>, window_params = [{transform_indices = @transform_0, window_bounds = array<i64: 8, 128>}, {transform_indices = @transform_1, window_bounds = array<i64: 8, 128>}, {transform_indices = @transform_2, window_bounds = array<i64: 128, 128>}, {pipeline_mode = #tpu.pipeline_mode<synchronous>, transform_indices = @transform_3, window_bounds = array<i64: 1, 128>}, {pipeline_mode = #tpu.pipeline_mode<synchronous>, transform_indices = @transform_4, window_bounds = array<i64: 1, 128>}, {transform_indices = @transform_5, window_bounds = array<i64: 1, 1>}, {transform_indices = @transform_6, window_bounds = array<i64: 8, 1>}]} {
    %c0_i32 = arith.constant 0 : i32
    %0 = arith.cmpi eq, %arg1, %c0_i32 : i32
    %1 = arith.extui %0 : i1 to i32
    %c0_i32_0 = arith.constant 0 : i32
    %2 = arith.cmpi ne, %1, %c0_i32_0 : i32
    scf.if %2 {
      %cst_12 = arith.constant 0.000000e+00 : f32
      %16 = vector.broadcast %cst_12 : f32 to vector<8x128xf32>
      %c0_13 = arith.constant 0 : index
      %c0_14 = arith.constant 0 : index
      %17 = vector.load %arg9[%c0_13, %c0_14] : memref<8x128xf32, #tpu.memory_space<vmem>>, vector<8x128xf32>
      tpu.vector_store %arg9[%c0_13, %c0_14], %16 {strides = array<i32>} : memref<8x128xf32, #tpu.memory_space<vmem>>, vector<8x128xf32>,
    } else {
    }
    %c0 = arith.constant 0 : index
    %c0_1 = arith.constant 0 : index
    %3 = vector.load %arg3[%c0, %c0_1] : memref<8x128xf32, #tpu.memory_space<vmem>>, vector<8x128xf32>
    %c0_2 = arith.constant 0 : index
    %c0_3 = arith.constant 0 : index
    %4 = vector.load %arg2[%c0_2, %c0_3] : memref<8x128xf32, #tpu.memory_space<vmem>>, vector<8x128xf32>
    %5 = arith.subf %3, %4 : vector<8x128xf32>
    %6 = math.absf %5 : vector<8x128xf32>
    %c0_4 = arith.constant 0 : index
    %c0_5 = arith.constant 0 : index
    %7 = vector.load %arg9[%c0_4, %c0_5] : memref<8x128xf32, #tpu.memory_space<vmem>>, vector<8x128xf32>
    %8 = arith.truncf %6 : vector<8x128xf32> to vector<8x128xbf16>
    %c0_6 = arith.constant 0 : index
    %c0_7 = arith.constant 0 : index
    %9 = vector.load %arg4[%c0_6, %c0_7] : memref<128x128xbf16, #tpu.memory_space<vmem>>, vector<128x128xbf16>
    %cst = arith.constant dense<0.000000e+00> : vector<8x128xf32>
    %10 = tpu.matmul %8, %9, %cst {dimension_numbers = #tpu.dot_dimension_numbers<[1], [0], [0], [1], [0, 0, 1, 1], [], []>} : vector<8x128xbf16>, vector<128x128xbf16>, vector<8x128xf32> -> vector<8x128xf32>
    %11 = arith.addf %7, %10 : vector<8x128xf32>
    %c0_8 = arith.constant 0 : index
    %c0_9 = arith.constant 0 : index
    %12 = vector.load %arg9[%c0_8, %c0_9] : memref<8x128xf32, #tpu.memory_space<vmem>>, vector<8x128xf32>
    tpu.vector_store %arg9[%c0_8, %c0_9], %11 {strides = array<i32>} : memref<8x128xf32, #tpu.memory_space<vmem>>, vector<8x128xf32>,
    %c0_i32_10 = arith.constant 0 : i32
    %13 = arith.cmpi eq, %arg1, %c0_i32_10 : i32
    %14 = arith.extui %13 : i1 to i32
    %c0_i32_11 = arith.constant 0 : i32
    %15 = arith.cmpi ne, %14, %c0_i32_11 : i32
    scf.if %15 {
      %c0_12 = arith.constant 0 : index
      %c0_13 = arith.constant 0 : index
      %16 = vector.load %arg9[%c0_12, %c0_13] : memref<8x128xf32, #tpu.memory_space<vmem>>, vector<8x128xf32>
      %c0_14 = arith.constant 0 : index
      %c0_15 = arith.constant 0 : index
      %17 = vector.load %arg5[%c0_14, %c0_15] : memref<1x128xf32, #tpu.memory_space<vmem>>, vector<1x128xf32>
      %18 = vector.broadcast %17 : vector<1x128xf32> to vector<8x128xf32>
      %19 = arith.addf %16, %18 : vector<8x128xf32>
      %cst_16 = arith.constant 0.000000e+00 : f32
      %20 = vector.broadcast %cst_16 : f32 to vector<8x128xf32>
      %21 = arith.maximumf %19, %20 : vector<8x128xf32>
      %c0_17 = arith.constant 0 : index
      %c0_18 = arith.constant 0 : index
      %22 = vector.load %arg6[%c0_17, %c0_18] : memref<1x128xf32, #tpu.memory_space<vmem>>, vector<1x128xf32>
      %23 = vector.broadcast %22 : vector<1x128xf32> to vector<8x128xf32>
      %24 = arith.mulf %21, %23 : vector<8x128xf32>
      %cst_19 = arith.constant dense<0.000000e+00> : vector<8xf32>
      %25 = vector.multi_reduction <add>, %24, %cst_19 [1] : vector<8x128xf32> to vector<8xf32>
      %26 = vector.shape_cast %25 : vector<8xf32> to vector<8x1xf32>
      %c0_20 = arith.constant 0 : index
      %c0_21 = arith.constant 0 : index
      %27 = memref.load %arg7[%c0_20, %c0_21] : memref<1x1xf32, #tpu.memory_space<smem>>
      %28 = vector.broadcast %27 : f32 to vector<8x1xf32>
      %29 = arith.addf %26, %28 : vector<8x1xf32>
      %30 = math.absf %29 : vector<8x1xf32>
      %c0_22 = arith.constant 0 : index
      %c0_23 = arith.constant 0 : index
      %31 = vector.load %arg8[%c0_22, %c0_23] : memref<8x1xf32, #tpu.memory_space<vmem>>, vector<8x1xf32>
      tpu.vector_store %arg8[%c0_22, %c0_23], %30 {strides = array<i32>} : memref<8x1xf32, #tpu.memory_space<vmem>>, vector<8x1xf32>,
    } else {
    }
    return
  }
  func.func @transform_0(%arg0: i32, %arg1: i32) -> (i32, i32) {
    %c0_i32 = arith.constant 0 : i32
    return %arg0, %arg1 : i32, i32
  }
  func.func @transform_1(%arg0: i32, %arg1: i32) -> (i32, i32) {
    %c0_i32 = arith.constant 0 : i32
    return %arg0, %arg1 : i32, i32
  }
  func.func @transform_2(%arg0: i32, %arg1: i32) -> (i32, i32) {
    %c0_i32 = arith.constant 0 : i32
    %c0_i32_0 = arith.constant 0 : i32
    return %arg1, %c0_i32 : i32, i32
  }
  func.func @transform_3(%arg0: i32, %arg1: i32) -> (i32, i32) {
    %c0_i32 = arith.constant 0 : i32
    %c0_i32_0 = arith.constant 0 : i32
    %c0_i32_1 = arith.constant 0 : i32
    return %c0_i32, %c0_i32_0 : i32, i32
  }
  func.func @transform_4(%arg0: i32, %arg1: i32) -> (i32, i32) {
    %c0_i32 = arith.constant 0 : i32
    %c0_i32_0 = arith.constant 0 : i32
    %c0_i32_1 = arith.constant 0 : i32
    return %c0_i32, %c0_i32_0 : i32, i32
  }
  func.func @transform_5(%arg0: i32, %arg1: i32) -> (i32, i32) {
    %c0_i32 = arith.constant 0 : i32
    %c0_i32_0 = arith.constant 0 : i32
    %c0_i32_1 = arith.constant 0 : i32
    return %c0_i32, %c0_i32_0 : i32, i32
  }
  func.func @transform_6(%arg0: i32, %arg1: i32) -> (i32, i32) {
    %c0_i32 = arith.constant 0 : i32
    %c0_i32_0 = arith.constant 0 : i32
    return %arg0, %c0_i32 : i32, i32
  }
}

</mosaic_0001>

<llo_original>
// kernel: _lambda_.1
$region0: #{_lambda_.1}
  #allocation0 [shape = 'u32[]', space=smem, size = 0x4, offset = 0x4, fixed_abs, tag = 'smem constant byte address 0x4 - core index']
  #allocation1 [shape = 'u32[144,128]{1,0:T(1,128)}', space=vmem, size = 0x12000, scoped, tag = 'internal scratch']
  #allocation2 [shape = 'f32[8,128]{1,0:T(8,128)}', space=vmem, size = 0x1000, scoped, tag = 'scratch operand']
  #allocation3 [shape = 'f32[1,1]{1,0:T(1,128)S(6)}', space=smem, size = 0x200, scoped, tag = 'scoped memory for _lambda_.1']
  %s0 = inlined_call_operand.vmem [shape: f32[8,128], index: 0, kind: input, shape index: {}]
  %s1 = inlined_call_operand.vmem [shape: f32[8,128], index: 1, kind: input, shape index: {}]
  %s2 = inlined_call_operand.hbm [shape: bf16[128,128], index: 2, kind: input, shape index: {}]
  %s3 = inlined_call_operand.vmem [shape: f32[1,128], index: 3, kind: input, shape index: {}]
  %s4 = inlined_call_operand.vmem [shape: f32[1,128], index: 4, kind: input, shape index: {}]
  %s5 = inlined_call_operand.<no memory space> [shape: f32[1,1], index: 5, kind: input, shape index: {}]
  %s6 = inlined_call_operand.vmem [shape: f32[8,1], index: 6, kind: output, shape index: {}]
  %s7 = sld [smem:[#allocation0]]
  $region46: #{_lambda_.1} parent=0
    _
  %s9 = ssub.s32 1, %s7
  %s10 = scalar_select 0, %s9, %s7
  %11 = sst [smem:[#allocation3]] %s5
  $region1: #{_lambda_.1} parent=0
    #allocation4 [shape = 'u8[32768]{0}', space=vmem, size = 0x8000, scoped, tag = 'input window, operand 2, single buffered']
    #allocation5 [shape = 's32[1]{0}', space=sflag, size = 0x4, scoped, tag = 'scoped memory for _lambda_.1']
    %12 = vsyncpa [#allocation5], 0
    // Predicated region
    $region2: #{_lambda_.1} parent=1 // pred_check
      _
    $region3: #{_lambda_.1} parent=1 // pred_check_branch
      %14 = sbr.rel (0) target = $region5
    $region4: #{_lambda_.1} parent=1 // pred_region
      _
    $region5: #{_lambda_.1} parent=1 // pred_fallthru
      _
    // Predicated region
    $region6: #{_lambda_.1} parent=1 // pred_check
      _
    $region7: #{_lambda_.1} parent=1 // pred_check_branch
      %16 = sbr.rel (0) target = $region9
    $region8: #{_lambda_.1} parent=1 // pred_region
      _
    $region9: #{_lambda_.1} parent=1 // pred_fallthru
      _
    // Predicated region
    $region10: #{_lambda_.1} parent=1 // pred_check
      _
    $region11: #{_lambda_.1} parent=1 // pred_check_branch
      %18 = sbr.rel (0) target = $region13
    $region12: #{_lambda_.1} parent=1 // pred_region
      %s20 = ssub.s32 1024, 1024
      %21 = vsyncadd [#allocation5], %s20
      %s22 = sshll.u32 [#allocation4], 4
      %s23 = int_to_ptr.vmem [resolvable:$true] %s22
      %28 = dma.hbm_to_vmem [thread:$0]  %s2, 1024, %s23, [#allocation5], 64, 64, 4
    $region13: #{_lambda_.1} parent=1 // pred_fallthru
      _
    // Predicated region
    $region14: #{_lambda_.1} parent=1 // pred_check
      _
    $region15: #{_lambda_.1} parent=1 // pred_check_branch
      %30 = sbr.rel (0) target = $region17
    $region16: #{_lambda_.1} parent=1 // pred_region
      _
    $region17: #{_lambda_.1} parent=1 // pred_fallthru
      _
    // Predicated region
    $region18: #{_lambda_.1} parent=1 // pred_check
      _
    $region19: #{_lambda_.1} parent=1 // pred_check_branch
      %32 = sbr.rel (0) target = $region21
    $region20: #{_lambda_.1} parent=1 // pred_region
      _
    $region21: #{_lambda_.1} parent=1 // pred_fallthru
      _
    // Predicated region
    $region22: #{_lambda_.1} parent=1 // pred_check
      _
    $region23: #{_lambda_.1} parent=1 // pred_check_branch
      %34 = sbr.rel (0) target = $region25
    $region24: #{_lambda_.1} parent=1 // pred_region
      _
    $region25: #{_lambda_.1} parent=1 // pred_fallthru
      _
    // Predicated region
    $region26: #{_lambda_.1} parent=1 // pred_check
      _
    $region27: #{_lambda_.1} parent=1 // pred_check_branch
      %36 = sbr.rel (0) target = $region29
    $region28: #{_lambda_.1} parent=1 // pred_region
      %37 = dma.done [#allocation5], 1024
    $region29: #{_lambda_.1} parent=1 // pred_fallthru
      _
    %p39 = scmp.eq.s32.totalorder 0, 0
    // Predicated region
    $region30: #{_lambda_.1} parent=1 // pred_check
      %p40 = pneg %p39
    $region31: #{_lambda_.1} parent=1 // pred_check_branch
      %42 = sbr.rel (%p40) target = $region33
    $region32: #{_lambda_.1} parent=1 // pred_region
      %43 = vst [vmem:[#allocation2] sm:$0xff] 0.0
    $region33: #{_lambda_.1} parent=1 // pred_fallthru
      _
    %v44 = vld [vmem:[%s1] sm:$0xff]
    %v45 = vld [vmem:[%s0] sm:$0xff]
    %v46 = vsub.f32 %v44, %v45
    %v47 = vand.u32 2147483647, %v46
    %v48 = vld [vmem:[#allocation2] sm:$0xff]
    %v49 = vpack.c.bf16 %v47, %v47
    %v50 = vld [vmem:[#allocation4] sm:$0xf]
    %v51 = vld [vmem:[#allocation4 + $0x4] sm:$0xf]
    %v52 = vld [vmem:[#allocation4 + $0x8] sm:$0xf]
    %v53 = vld [vmem:[#allocation4 + $0xc] sm:$0xf]
    %v54 = vld [vmem:[#allocation4 + $0x10] sm:$0xf]
    %v55 = vld [vmem:[#allocation4 + $0x14] sm:$0xf]
    %v56 = vld [vmem:[#allocation4 + $0x18] sm:$0xf]
    %v57 = vld [vmem:[#allocation4 + $0x1c] sm:$0xf]
    %v58 = vld [vmem:[#allocation4 + $0x20] sm:$0xf]
    %v59 = vld [vmem:[#allocation4 + $0x24] sm:$0xf]
    %v60 = vld [vmem:[#allocation4 + $0x28] sm:$0xf]
    %v61 = vld [vmem:[#allocation4 + $0x2c] sm:$0xf]
    %v62 = vld [vmem:[#allocation4 + $0x30] sm:$0xf]
    %v63 = vld [vmem:[#allocation4 + $0x34] sm:$0xf]
    %v64 = vld [vmem:[#allocation4 + $0x38] sm:$0xf]
    %v65 = vld [vmem:[#allocation4 + $0x3c] sm:$0xf]
    %v82 = vunpack.c.l.b16 %v50
    %v83 = vunpack.c.l.b16 %v51
    %v84 = vunpack.c.l.b16 %v52
    %v85 = vunpack.c.l.b16 %v53
    %v86 = vunpack.c.l.b16 %v54
    %v87 = vunpack.c.l.b16 %v55
    %v88 = vunpack.c.l.b16 %v56
    %v89 = vunpack.c.l.b16 %v57
    %v90 = vunpack.c.l.b16 %v58
    %v91 = vunpack.c.l.b16 %v59
    %v92 = vunpack.c.l.b16 %v60
    %v93 = vunpack.c.l.b16 %v61
    %v94 = vunpack.c.l.b16 %v62
    %v95 = vunpack.c.l.b16 %v63
    %v96 = vunpack.c.l.b16 %v64
    %v97 = vunpack.c.l.b16 %v65
    %v98 = vpack.c.b16 %v83, %v82
    %v99 = vpack.c.b16 %v85, %v84
    %v100 = vpack.c.b16 %v87, %v86
    %v101 = vpack.c.b16 %v89, %v88
    %v102 = vpack.c.b16 %v91, %v90
    %v103 = vpack.c.b16 %v93, %v92
    %v104 = vpack.c.b16 %v95, %v94
    %v105 = vpack.c.b16 %v97, %v96
    %114 = vmatprep.subr.bf16.mxu0 0
    %115 = vmatpush1.bf16.msra.mxu0 %v98
    %116 = vmatprep.subr.bf16.mxu0 0
    %117 = vmatpush1.bf16.msra.mxu0 %v99
    %118 = vmatprep.subr.bf16.mxu0 0
    %119 = vmatpush1.bf16.msra.mxu0 %v100
    %120 = vmatprep.subr.bf16.mxu0 0
    %121 = vmatpush1.bf16.msra.mxu0 %v101
    %122 = vmatprep.subr.bf16.mxu0 0
    %123 = vmatpush1.bf16.msra.mxu0 %v102
    %124 = vmatprep.subr.bf16.mxu0 0
    %125 = vmatpush1.bf16.msra.mxu0 %v103
    %126 = vmatprep.subr.bf16.mxu0 0
    %127 = vmatpush1.bf16.msra.mxu0 %v104
    %128 = vmatprep.subr.bf16.mxu0 0
    %129 = vmatpush1.bf16.msra.mxu0 %v105
    %130 = vmatprep.subr.bf16.mxu0 0
    %131 = vmatpush1.bf16.msra.mxu0 0
    %132 = vmatprep.subr.bf16.mxu0 0
    %133 = vmatpush1.bf16.msra.mxu0 0
    %134 = vmatprep.subr.bf16.mxu0 0
    %135 = vmatpush1.bf16.msra.mxu0 0
    %136 = vmatprep.subr.bf16.mxu0 0
    %137 = vmatpush1.bf16.msra.mxu0 0
    %138 = vmatprep.subr.bf16.mxu0 0
    %139 = vmatpush1.bf16.msra.mxu0 0
    %140 = vmatprep.subr.bf16.mxu0 0
    %141 = vmatpush1.bf16.msra.mxu0 0
    %142 = vmatprep.subr.bf16.mxu0 0
    %143 = vmatpush1.bf16.msra.mxu0 0
    %144 = vmatprep.subr.bf16.mxu0 0
    %145 = vmatpush1.bf16.msra.mxu0 0
    %146 = vmatprep.mubr.bf16.mxu0 0
    %147 = vmatmul.mubr.bf16.gmra.mrb[0].mxu0 %v49
    %v148 = vpop.f32.mrb[0].mxu0
    %v149 = vadd.f32 0.0, %v148
    %v150 = vpop.f32.mrb[0].mxu0
    %v151 = vpop.f32.mrb[0].mxu0
    %v152 = vpop.f32.mrb[0].mxu0
    %153 = vdwg.mxu0
    %v154 = vadd.f32 %v48, %v149
    %155 = vst [vmem:[#allocation2] sm:$0xff] %v154
    // Predicated region
    $region34: #{_lambda_.1} parent=1 // pred_check
      %p156 = pneg %p39
    $region35: #{_lambda_.1} parent=1 // pred_check_branch
      %158 = sbr.rel (%p156) target = $region37
    $region36: #{_lambda_.1} parent=1 // pred_region
      %v159 = vld [vmem:[#allocation2] sm:$0xff]
      %v160 = vld [vmem:[%s3] sm:$0x1]
      %v162 = vlaneseq
      %v163 = vshrl.u32 %v162, 7
      %v164 = vsub.s32 0, %v163
      %v165 = vrot.slane %v160, %v164
      %v167 = vadd.f32 %v159, %v165
      %v168 = vmax.f32 %v167, 0.0
      %v169 = vld [vmem:[%s4] sm:$0x1]
      %v171 = vlaneseq
      %v172 = vshrl.u32 %v171, 7
      %v173 = vsub.s32 0, %v172
      %v174 = vrot.slane %v169, %v173
      %v176 = vmul.f32 %v168, %v174
      %177 = vadd.xlane.f32.xlu0 %v176
      %v178 = vpop.xlane.xlu0 %177
      %s179 = sld [smem:[#allocation3]]
      %v180 = vstv %s179
      %v181 = vadd.f32 %v178, %v180
      %v182 = vand.u32 2147483647, %v181
      %vm183 = vcmask 7168
      %184 = vst.msk [vmem:[%s6] sm:$0xff] %vm183, %v182
    $region37: #{_lambda_.1} parent=1 // pred_fallthru
      _
    // Predicated region
    $region38: #{_lambda_.1} parent=1 // pred_check
      _
    $region39: #{_lambda_.1} parent=1 // pred_check_branch
      %186 = sbr.rel (0) target = $region41
    $region40: #{_lambda_.1} parent=1 // pred_region
      _
    $region41: #{_lambda_.1} parent=1 // pred_fallthru
      _
    // Predicated region
    $region42: #{_lambda_.1} parent=1 // pred_check
      _
    $region43: #{_lambda_.1} parent=1 // pred_check_branch
      %188 = sbr.rel (0) target = $region45
    $region44: #{_lambda_.1} parent=1 // pred_region
      _
    $region45: #{_lambda_.1} parent=1 // pred_fallthru
      _
    %189 = vsyncpa [#allocation5], 1

</llo_original>
